<compile_context>
chip_gen: v7x
topology: tpu7x:2x2x1
jax: 0.10.0
libtpu: 0.0.40
codegen_flags: <defaults>
</compile_context>

<pallas_src>
import functools

import jax
import jax.numpy as jnp
from jax import lax
from jax.experimental import pallas as pl
from jax.experimental.pallas import tpu as pltpu


# --------------------------- VMEM / tiling helpers -------------------------- #
@functools.lru_cache(maxsize=None)
def _vmem_limit():
    """Per-generation scoped VMEM budget (bytes), with headroom for Mosaic scratch."""
    try:
        cap = int(getattr(pltpu.get_tpu_info(), "vmem_capacity_bytes"))
    except Exception:  # fall back to the smallest current generation (v7x: 64 MiB)
        cap = 64 * 1024 * 1024
    return max(32 * 1024 * 1024, min(cap - 8 * 1024 * 1024, 112 * 1024 * 1024))


def _tile(dim, cands=(512, 256, 128)):
    """Return (tile, padded_dim).  Prefer large exact divisors (MXU/pipeline friendly);
    otherwise pad up to a 128-multiple (or 8-multiple for small dims) so blocks stay
    (8,128)-aligned and the grid stays pipelined instead of one full-extent block."""
    for c in cands:
        if dim % c == 0:
            return c, dim
    if dim <= cands[-1]:
        t = -(-dim // 8) * 8
        return t, t
    c = cands[-1]
    return c, -(-dim // c) * c


def _pad_axis(x, axis, target):
    if x.shape[axis] == target:
        return x
    pad = [(0, 0)] * x.ndim
    pad[axis] = (0, target - x.shape[axis])
    return jnp.pad(x, pad)


# ------------------------------- linear ------------------------------------ #
def _linear_kernel(x_ref, w_ref, b_ref, o_ref, acc_ref):
    # grid = (M tiles, N tiles, K tiles); K is an "arbitrary" reduction axis.
    @pl.when(pl.program_id(2) == 0)
    def _():
        acc_ref[...] = jnp.zeros_like(acc_ref)

    acc_ref[...] += jnp.dot(x_ref[...], w_ref[...],
                            preferred_element_type=jnp.float32)

    @pl.when(pl.program_id(2) == pl.num_programs(2) - 1)
    def _():
        o_ref[...] = (acc_ref[...] + b_ref[...].astype(jnp.float32)).astype(o_ref.dtype)


def linear(x, w, b):
    """x:[M,K] @ w:[K,N] + b:[N] -> [M,N], tiled over M, N and K (fp32 accumulate)."""
    M, K = x.shape
    N = w.shape[1]
    tm, Mp = _tile(M)
    tn, Np = _tile(N)
    tk, Kp = _tile(K)

    xp = _pad_axis(_pad_axis(x, 0, Mp), 1, Kp)          # zero pads: no-op when aligned
    wp = _pad_axis(_pad_axis(w, 0, Kp), 1, Np)
    bp = _pad_axis(b.reshape(1, N), 1, Np)

    out = pl.pallas_call(
        _linear_kernel,
        out_shape=jax.ShapeDtypeStruct((Mp, Np), x.dtype),
        grid=(Mp // tm, Np // tn, Kp // tk),
        in_specs=[
            pl.BlockSpec((tm, tk), lambda i, j, kk: (i, kk)),
            pl.BlockSpec((tk, tn), lambda i, j, kk: (kk, j)),
            pl.BlockSpec((1, tn), lambda i, j, kk: (0, j)),
        ],
        out_specs=pl.BlockSpec((tm, tn), lambda i, j, kk: (i, j)),
        scratch_shapes=[pltpu.VMEM((tm, tn), jnp.float32)],
        compiler_params=pltpu.CompilerParams(
            dimension_semantics=("parallel", "parallel", "arbitrary"),
            vmem_limit_bytes=_vmem_limit()),
    )(xp, wp, bp)
    if (Mp, Np) != (M, N):
        out = out[:M, :N]
    return out


# ------------------------------ attention ---------------------------------- #
def _attn_kernel(*refs, have_bias):
    # refs: q, k, v, [bias], wo, bo, out, acc_scratch
    if have_bias:
        q_ref, k_ref, v_ref, b_ref, wo_ref, bo_ref, o_ref, acc_ref = refs
    else:
        q_ref, k_ref, v_ref, wo_ref, bo_ref, o_ref, acc_ref = refs
        b_ref = None

    h = pl.program_id(2)

    @pl.when(h == 0)
    def _():
        acc_ref[...] = jnp.zeros_like(acc_ref)

    q = q_ref[0, 0]                    # (tq, d); softmax scale already folded into Wq
    k = k_ref[0, 0]                    # (Sk, d)
    v = v_ref[0, 0]                    # (Sk, d)

    # scores: contract d of (tq,d) x (Sk,d) -> (tq,Sk); no explicit K transpose.
    s = lax.dot_general(q, k, (((1,), (1,)), ((), ())),
                        preferred_element_type=jnp.float32)
    if have_bias:
        s = s + b_ref[0, 0].astype(jnp.float32)

    # numerically-stable softmax over keys (== torch.softmax(dim=3))
    m = jnp.max(s, axis=-1, keepdims=True)
    e = jnp.exp(s - m)
    p = e * pl.reciprocal(jnp.sum(e, axis=-1, keepdims=True), approx=True)

    # TODO(synk): training-mode attention dropout would be applied to `p` here.
    ctx = jnp.dot(p.astype(v.dtype), v, preferred_element_type=jnp.float32)   # (tq, d)

    # fused output projection: this head's contribution to out = ctx @ Wo[h]
    wo_h = wo_ref[h]                   # (d, H); Wo resident whole in VMEM
    acc_ref[...] += jnp.dot(ctx.astype(wo_h.dtype), wo_h,
                            preferred_element_type=jnp.float32)

    @pl.when(h == pl.num_programs(2) - 1)
    def _():
        o_ref[0] = (acc_ref[...] + bo_ref[...].astype(jnp.float32)).astype(o_ref.dtype)


def _attention(qh, kh, vh, attn_bias, wo, bo):
    """qh:[B,nh,Sq,d] (already scaled), kh/vh:[B,nh,Sk,d], wo:[nh*d,H], bo:[H],
    attn_bias: None or rank-4 broadcastable [bB,bH,*,*].  Returns [B,Sq,H]."""
    B, nh, Sq, d = qh.shape
    Sk = kh.shape[2]
    H = wo.shape[1]
    dtype = qh.dtype
    isz = dtype.itemsize
    budget = _vmem_limit()

    tq, Sq_pad = _tile(Sq)

    def est(t):  # rough per-step VMEM estimate (double-buffered I/O + fp32 temps)
        by = 2 * (t * d + 2 * Sk * d + t * H) * isz
        if attn_bias is not None:
            by += 2 * t * Sk * 4
        by += 3 * t * Sk * 4              # fp32 score/exp intermediates
        by += t * H * 4                   # accumulator scratch
        by += 2 * nh * d * H * wo.dtype.itemsize
        return by

    while tq > 8 and tq % 16 == 0 and est(tq) > budget:
        tq //= 2

    qh = _pad_axis(qh, 2, Sq_pad)

    have_bias = attn_bias is not None
    args = [qh, kh, vh]
    in_specs = [
        pl.BlockSpec((1, 1, tq, d), lambda b, qi, h: (b, h, qi, 0)),
        pl.BlockSpec((1, 1, Sk, d), lambda b, qi, h: (b, h, 0, 0)),
        pl.BlockSpec((1, 1, Sk, d), lambda b, qi, h: (b, h, 0, 0)),
    ]
    if have_bias:
        assert attn_bias.ndim == 4, "attn_bias must be rank-4 (broadcastable)"
        bB, bH, bQ, bK = attn_bias.shape
        assert bB in (1, B) and bH in (1, nh) and bQ in (1, Sq) and bK in (1, Sk)
        if bQ == 1 or bK == 1:
            # broadcast only the trailing (Sq,Sk) dims; batch/head broadcasting is
            # handled by the index_map and never materialised in HBM.
            attn_bias = jnp.broadcast_to(attn_bias, (bB, bH, Sq, Sk))
        attn_bias = _pad_axis(attn_bias, 2, Sq_pad)
        in_specs.append(pl.BlockSpec(
            (1, 1, tq, Sk),
            lambda b, qi, h, _bB=bB, _bH=bH: ((b if _bB > 1 else 0),
                                              (h if _bH > 1 else 0), qi, 0)))
        args.append(attn_bias)

    wo3 = wo.reshape(nh, d, H)          # per-head output-projection weights
    bo2 = bo.reshape(1, H)
    in_specs += [
        pl.BlockSpec((nh, d, H), lambda b, qi, h: (0, 0, 0)),   # whole Wo, resident
        pl.BlockSpec((1, H), lambda b, qi, h: (0, 0)),
    ]
    args += [wo3, bo2]

    out = pl.pallas_call(
        functools.partial(_attn_kernel, have_bias=have_bias),
        out_shape=jax.ShapeDtypeStruct((B, Sq_pad, H), dtype),
        grid=(B, Sq_pad // tq, nh),
        in_specs=in_specs,
        out_specs=pl.BlockSpec((1, tq, H), lambda b, qi, h: (b, qi, 0)),
        scratch_shapes=[pltpu.VMEM((tq, H), jnp.float32)],
        compiler_params=pltpu.CompilerParams(
            dimension_semantics=("parallel", "parallel", "arbitrary"),
            vmem_limit_bytes=_vmem_limit()),
    )(*args)
    if Sq_pad != Sq:
        out = out[:, :Sq, :]
    return out


# -------------------------------- module ----------------------------------- #
def init_params(key, hidden_size, num_heads, dtype=jnp.float32):
    att_size = hidden_size // num_heads
    proj = num_heads * att_size
    ks = jax.random.split(key, 8)
    s_in = 1.0 / jnp.sqrt(hidden_size).astype(dtype)
    s_pr = 1.0 / jnp.sqrt(proj).astype(dtype)
    return {
        "wq": jax.random.uniform(ks[0], (hidden_size, proj), dtype, -s_in, s_in),
        "bq": jax.random.uniform(ks[1], (proj,), dtype, -s_in, s_in),
        "wk": jax.random.uniform(ks[2], (hidden_size, proj), dtype, -s_in, s_in),
        "bk": jax.random.uniform(ks[3], (proj,), dtype, -s_in, s_in),
        "wv": jax.random.uniform(ks[4], (hidden_size, proj), dtype, -s_in, s_in),
        "bv": jax.random.uniform(ks[5], (proj,), dtype, -s_in, s_in),
        "wo": jax.random.uniform(ks[6], (proj, hidden_size), dtype, -s_pr, s_pr),
        "bo": jax.random.uniform(ks[7], (hidden_size,), dtype, -s_pr, s_pr),
    }


def multi_head_attention(params, q, k, v, attn_bias=None, *, num_heads):
    B, Sq, H = q.shape
    Sk = k.shape[1]
    d = H // num_heads
    P = num_heads * d
    scale = float(d) ** (-0.5)

    # fold the softmax scale into the Q projection: (x Wq + bq)*scale == x(Wq*s)+bq*s
    wq = params["wq"] * scale
    bq = params["bq"] * scale

    if q is k and k is v:
        # fused QKV projection for self-attention: read the activations once.
        w_qkv = jnp.concatenate([wq, params["wk"], params["wv"]], axis=1)   # [H, 3P]
        b_qkv = jnp.concatenate([bq, params["bk"], params["bv"]], axis=0)   # [3P]
        qkv = linear(q.reshape(B * Sq, H), w_qkv, b_qkv)                    # [B*Sq, 3P]
        qkv = qkv.reshape(B, Sq, 3, num_heads, d).transpose(2, 0, 3, 1, 4)  # [3,B,nh,S,d]
        qh, kh, vh = qkv[0], qkv[1], qkv[2]
    else:
        qh = linear(q.reshape(B * Sq, H), wq, bq)
        kh = linear(k.reshape(B * Sk, H), params["wk"], params["bk"])
        vh = linear(v.reshape(B * Sk, H), params["wv"], params["bv"])
        # head-major [B, nh, S, d] so the attention kernel can stream per-head blocks
        qh = qh.reshape(B, Sq, num_heads, d).transpose(0, 2, 1, 3)
        kh = kh.reshape(B, Sk, num_heads, d).transpose(0, 2, 1, 3)
        vh = vh.reshape(B, Sk, num_heads, d).transpose(0, 2, 1, 3)

    # attention + fused output projection -> [B, Sq, H]
    return _attention(qh, kh, vh, attn_bias, params["wo"], params["bo"])


# ------------------------------- reference --------------------------------- #
def _reference(params, q, k, v, attn_bias, num_heads):
    B, Sq, H = q.shape
    Sk = k.shape[1]
    d = H // num_heads
    scale = float(d) ** (-0.5)
    qp = (q.reshape(-1, H) @ params["wq"] + params["bq"]).reshape(B, Sq, num_heads, d)
    kp = (k.reshape(-1, H) @ params["wk"] + params["bk"]).reshape(B, Sk, num_heads, d)
    vp = (v.reshape(-1, H) @ params["wv"] + params["bv"]).reshape(B, Sk, num_heads, d)
    qhh = jnp.transpose(qp, (0, 2, 1, 3)) * scale
    khh = jnp.transpose(kp, (0, 2, 1, 3))
    vhh = jnp.transpose(vp, (0, 2, 1, 3))
    s = jnp.einsum("bhqd,bhkd->bhqk", qhh, khh)
    if attn_bias is not None:
        s = s + attn_bias
    p = jax.nn.softmax(s, axis=-1)
    ctx = jnp.einsum("bhqk,bhkd->bhqd", p, vhh)
    ctx = jnp.transpose(ctx, (0, 2, 1, 3)).reshape(B, Sq, num_heads * d)
    return ctx @ params["wo"] + params["bo"]


if __name__ == "__main__":
    B, S, H, NH = 2, 8, 32, 4
    key = jax.random.PRNGKey(0)
    kq, kk, kv, kb, kp = jax.random.split(key, 5)

    q = jax.random.normal(kq, (B, S, H), jnp.float32)
    k = jax.random.normal(kk, (B, S, H), jnp.float32)
    v = jax.random.normal(kv, (B, S, H), jnp.float32)
    attn_bias = 0.1 * jax.random.normal(kb, (B, NH, S, S), jnp.float32)

    params = init_params(kp, H, NH)

    # cross-attention path (separate q/k/v, with bias)
    out = multi_head_attention(params, q, k, v, attn_bias, num_heads=NH)
    out = jax.block_until_ready(out)
    ref = _reference(params, q, k, v, attn_bias, NH)
    assert out.shape == q.shape, (out.shape, q.shape)
    # Tolerance accounts for the EUP approx reciprocal in the softmax (~2^-12 rel).
    assert jnp.allclose(out, ref, atol=2e-3, rtol=2e-3), "mismatch (cross-attention)"

    # fused-QKV self-attention path, no bias
    out_sa = multi_head_attention(params, q, q, q, None, num_heads=NH)
    out_sa = jax.block_until_ready(out_sa)
    ref_sa = _reference(params, q, q, q, None, NH)
    assert jnp.allclose(out_sa, ref_sa, atol=2e-3, rtol=2e-3), "mismatch (self-attention)"

    print("KERNEL_OK")
</pallas_src>

<mosaic_0001>
module attributes {stable_mosaic.version = 11 : i64} {
  func.func @_linear_kernel(%arg0: i32, %arg1: i32, %arg2: i32, %arg3: memref<16x32xf32, #tpu.memory_space<vmem>>, %arg4: memref<32x32xf32, #tpu.memory_space<vmem>>, %arg5: memref<1x32xf32, #tpu.memory_space<vmem>>, %arg6: memref<16x32xf32, #tpu.memory_space<vmem>>, %arg7: memref<16x32xf32, #tpu.memory_space<vmem>>) attributes {dimension_semantics = [#tpu.dimension_semantics<parallel>, #tpu.dimension_semantics<parallel>, #tpu.dimension_semantics<arbitrary>], iteration_bounds = array<i64: 1, 1, 1>, scalar_prefetch = 0 : i64, scratch_operands = 1 : i64, tpu.core_type = #tpu.core_type<tc>, window_params = [{transform_indices = @transform_0, window_bounds = array<i64: 16, 32>}, {transform_indices = @transform_1, window_bounds = array<i64: 32, 32>}, {transform_indices = @transform_2, window_bounds = array<i64: 1, 32>}, {transform_indices = @transform_3, window_bounds = array<i64: 16, 32>}]} {
    %c0_i32 = arith.constant 0 : i32
    %0 = arith.cmpi eq, %arg2, %c0_i32 : i32
    %1 = arith.extui %0 : i1 to i32
    %c0_i32_0 = arith.constant 0 : i32
    %2 = arith.cmpi ne, %1, %c0_i32_0 : i32
    scf.if %2 {
      %cst_10 = arith.constant 0.000000e+00 : f32
      %12 = vector.broadcast %cst_10 : f32 to vector<16x32xf32>
      %c0_11 = arith.constant 0 : index
      %c0_12 = arith.constant 0 : index
      %13 = vector.load %arg7[%c0_11, %c0_12] : memref<16x32xf32, #tpu.memory_space<vmem>>, vector<16x32xf32>
      tpu.vector_store %arg7[%c0_11, %c0_12], %12 {strides = array<i32>} : memref<16x32xf32, #tpu.memory_space<vmem>>, vector<16x32xf32>,
    } else {
    }
    %c0 = arith.constant 0 : index
    %c0_1 = arith.constant 0 : index
    %3 = vector.load %arg7[%c0, %c0_1] : memref<16x32xf32, #tpu.memory_space<vmem>>, vector<16x32xf32>
    %c0_2 = arith.constant 0 : index
    %c0_3 = arith.constant 0 : index
    %4 = vector.load %arg3[%c0_2, %c0_3] : memref<16x32xf32, #tpu.memory_space<vmem>>, vector<16x32xf32>
    %c0_4 = arith.constant 0 : index
    %c0_5 = arith.constant 0 : index
    %5 = vector.load %arg4[%c0_4, %c0_5] : memref<32x32xf32, #tpu.memory_space<vmem>>, vector<32x32xf32>
    %cst = arith.constant dense<0.000000e+00> : vector<16x32xf32>
    %6 = tpu.matmul %4, %5, %cst {dimension_numbers = #tpu.dot_dimension_numbers<[1], [0], [0], [1], [0, 0, 1, 1], [], []>} : vector<16x32xf32>, vector<32x32xf32>, vector<16x32xf32> -> vector<16x32xf32>
    %7 = arith.addf %3, %6 : vector<16x32xf32>
    %c0_6 = arith.constant 0 : index
    %c0_7 = arith.constant 0 : index
    %8 = vector.load %arg7[%c0_6, %c0_7] : memref<16x32xf32, #tpu.memory_space<vmem>>, vector<16x32xf32>
    tpu.vector_store %arg7[%c0_6, %c0_7], %7 {strides = array<i32>} : memref<16x32xf32, #tpu.memory_space<vmem>>, vector<16x32xf32>,
    %c0_i32_8 = arith.constant 0 : i32
    %9 = arith.cmpi eq, %arg2, %c0_i32_8 : i32
    %10 = arith.extui %9 : i1 to i32
    %c0_i32_9 = arith.constant 0 : i32
    %11 = arith.cmpi ne, %10, %c0_i32_9 : i32
    scf.if %11 {
      %c0_10 = arith.constant 0 : index
      %c0_11 = arith.constant 0 : index
      %12 = vector.load %arg7[%c0_10, %c0_11] : memref<16x32xf32, #tpu.memory_space<vmem>>, vector<16x32xf32>
      %c0_12 = arith.constant 0 : index
      %c0_13 = arith.constant 0 : index
      %13 = vector.load %arg5[%c0_12, %c0_13] : memref<1x32xf32, #tpu.memory_space<vmem>>, vector<1x32xf32>
      %14 = vector.broadcast %13 : vector<1x32xf32> to vector<16x32xf32>
      %15 = arith.addf %12, %14 : vector<16x32xf32>
      %c0_14 = arith.constant 0 : index
      %c0_15 = arith.constant 0 : index
      %16 = vector.load %arg6[%c0_14, %c0_15] : memref<16x32xf32, #tpu.memory_space<vmem>>, vector<16x32xf32>
      tpu.vector_store %arg6[%c0_14, %c0_15], %15 {strides = array<i32>} : memref<16x32xf32, #tpu.memory_space<vmem>>, vector<16x32xf32>,
    } else {
    }
    return
  }
  func.func @transform_0(%arg0: i32, %arg1: i32, %arg2: i32) -> (i32, i32) {
    %c0_i32 = arith.constant 0 : i32
    return %arg0, %arg2 : i32, i32
  }
  func.func @transform_1(%arg0: i32, %arg1: i32, %arg2: i32) -> (i32, i32) {
    %c0_i32 = arith.constant 0 : i32
    return %arg2, %arg1 : i32, i32
  }
  func.func @transform_2(%arg0: i32, %arg1: i32, %arg2: i32) -> (i32, i32) {
    %c0_i32 = arith.constant 0 : i32
    %c0_i32_0 = arith.constant 0 : i32
    return %c0_i32, %arg1 : i32, i32
  }
  func.func @transform_3(%arg0: i32, %arg1: i32, %arg2: i32) -> (i32, i32) {
    %c0_i32 = arith.constant 0 : i32
    return %arg0, %arg1 : i32, i32
  }
}

</mosaic_0001>

<llo_original>
// kernel: tpu_custom_call.1
$region0: #{tpu_custom_call.1}
  #allocation0 [shape = 'u32[]', space=smem, size = 0x4, offset = 0x4, fixed_abs, tag = 'smem constant byte address 0x4 - core index']
  #allocation1 [shape = 'u32[144,128]{1,0:T(1,128)}', space=vmem, size = 0x12000, scoped, tag = 'internal scratch']
  #allocation2 [shape = 'f32[16,32]{1,0:T(8,128)}', space=vmem, size = 0x2000, scoped, tag = 'scratch operand']
  %s0 = inlined_call_operand.hbm [shape: f32[16,32], index: 0, kind: input, shape index: {}]
  %s1 = inlined_call_operand.hbm [shape: f32[32,32], index: 1, kind: input, shape index: {}]
  %s2 = inlined_call_operand.vmem [shape: f32[1,32], index: 2, kind: input, shape index: {}]
  %s3 = inlined_call_operand.hbm [shape: f32[16,32], index: 3, kind: output, shape index: {}]
  %s4 = sld [smem:[#allocation0]]
  $region38: #{tpu_custom_call.1} parent=0
    _
  %s6 = ssub.s32 1, %s4
  %s7 = scalar_select 0, %s6, %s4
  $region1: #{tpu_custom_call.1} parent=0
    #allocation3 [shape = 'u8[8192]{0}', space=vmem, size = 0x2000, scoped, tag = 'input window, operand 0, single buffered']
    #allocation4 [shape = 's32[1]{0}', space=sflag, size = 0x4, scoped, tag = 'scoped memory for tpu_custom_call.1']
    #allocation5 [shape = 's32[1]{0}', space=sflag, size = 0x4, scoped, tag = 'scoped memory for tpu_custom_call.1']
    #allocation6 [shape = 'u8[16384]{0}', space=vmem, size = 0x4000, scoped, tag = 'input window, operand 1, single buffered']
    #allocation7 [shape = 's32[1]{0}', space=sflag, size = 0x4, scoped, tag = 'scoped memory for tpu_custom_call.1']
    #allocation8 [shape = 'u8[8192]{0}', space=vmem, size = 0x2000, scoped, tag = 'output window, operand 0, single buffered']
    %8 = vsyncpa [#allocation4], 0
    %9 = vsyncpa [#allocation7], 0
    %10 = vsyncpa [#allocation5], 0
    // Predicated region
    $region2: #{tpu_custom_call.1} parent=1 // pred_check
      _
    $region3: #{tpu_custom_call.1} parent=1 // pred_check_branch
      %12 = sbr.rel (0) target = $region5
    $region4: #{tpu_custom_call.1} parent=1 // pred_region
      %s14 = ssub.s32 256, 256
      %15 = vsyncadd [#allocation4], %s14
      %s16 = sshll.u32 [#allocation3], 4
      %s17 = int_to_ptr.vmem [resolvable:$true] %s16
      %22 = dma.hbm_to_vmem [thread:$0]  %s0, 256, %s17, [#allocation4], 128, 128, 8
    $region5: #{tpu_custom_call.1} parent=1 // pred_fallthru
      _
    // Predicated region
    $region6: #{tpu_custom_call.1} parent=1 // pred_check
      _
    $region7: #{tpu_custom_call.1} parent=1 // pred_check_branch
      %24 = sbr.rel (0) target = $region9
    $region8: #{tpu_custom_call.1} parent=1 // pred_region
      %s26 = ssub.s32 512, 512
      %27 = vsyncadd [#allocation7], %s26
      %s28 = sshll.u32 [#allocation6], 4
      %s29 = int_to_ptr.vmem [resolvable:$true] %s28
      %34 = dma.hbm_to_vmem [thread:$0]  %s1, 512, %s29, [#allocation7], 128, 128, 8
    $region9: #{tpu_custom_call.1} parent=1 // pred_fallthru
      _
    // Predicated region
    $region10: #{tpu_custom_call.1} parent=1 // pred_check
      _
    $region11: #{tpu_custom_call.1} parent=1 // pred_check_branch
      %36 = sbr.rel (0) target = $region13
    $region12: #{tpu_custom_call.1} parent=1 // pred_region
      _
    $region13: #{tpu_custom_call.1} parent=1 // pred_fallthru
      _
    // Predicated region
    $region14: #{tpu_custom_call.1} parent=1 // pred_check
      _
    $region15: #{tpu_custom_call.1} parent=1 // pred_check_branch
      %38 = sbr.rel (0) target = $region17
    $region16: #{tpu_custom_call.1} parent=1 // pred_region
      %39 = dma.done [#allocation4], 256
    $region17: #{tpu_custom_call.1} parent=1 // pred_fallthru
      _
    // Predicated region
    $region18: #{tpu_custom_call.1} parent=1 // pred_check
      _
    $region19: #{tpu_custom_call.1} parent=1 // pred_check_branch
      %41 = sbr.rel (0) target = $region21
    $region20: #{tpu_custom_call.1} parent=1 // pred_region
      %42 = dma.done [#allocation7], 512
    $region21: #{tpu_custom_call.1} parent=1 // pred_fallthru
      _
    %p43 = scmp.eq.s32.totalorder 0, 0
    // Predicated region
    $region22: #{tpu_custom_call.1} parent=1 // pred_check
      %p44 = pneg %p43
    $region23: #{tpu_custom_call.1} parent=1 // pred_check_branch
      %46 = sbr.rel (%p44) target = $region25
    $region24: #{tpu_custom_call.1} parent=1 // pred_region
      %vm47 = vcmask 261120
      %48 = vst.msk [vmem:[#allocation2] sm:$0xff] %vm47, 0.0
      %49 = vst.msk [vmem:[#allocation2 + $0x8] sm:$0xff] %vm47, 0.0
    $region25: #{tpu_custom_call.1} parent=1 // pred_fallthru
      _
    %v50 = vld [vmem:[#allocation2] sm:$0xff]
    %v51 = vld [vmem:[#allocation2 + $0x8] sm:$0xff]
    %v52 = vld [vmem:[#allocation3] sm:$0xff]
    %v53 = vld [vmem:[#allocation3 + $0x8] sm:$0xff]
    %v54 = vld [vmem:[#allocation6] sm:$0xff]
    %v55 = vld [vmem:[#allocation6 + $0x8] sm:$0xff]
    %v56 = vld [vmem:[#allocation6 + $0x10] sm:$0xff]
    %v57 = vld [vmem:[#allocation6 + $0x18] sm:$0xff]
    %vm58 = vcmask 261120
    %v60 = vsel %vm58, %v52, 0
    %v63 = vsel %vm58, %v53, 0
    %65 = vmatprep.subr.mxu0 0.0
    %66 = vmatpush1.msra.mxu0 %v54
    %67 = vmatprep.subr.mxu0 0.0
    %68 = vmatpush1.msra.mxu0 %v55
    %69 = vmatprep.subr.mxu0 0.0
    %70 = vmatpush1.msra.mxu0 %v56
    %71 = vmatprep.subr.mxu0 0.0
    %72 = vmatpush1.msra.mxu0 %v57
    %73 = vmatprep.subr.mxu0 0.0
    %74 = vmatpush1.msra.mxu0 0.0
    %75 = vmatprep.subr.mxu0 0.0
    %76 = vmatpush1.msra.mxu0 0.0
    %77 = vmatprep.subr.mxu0 0.0
    %78 = vmatpush1.msra.mxu0 0.0
    %79 = vmatprep.subr.mxu0 0.0
    %80 = vmatpush1.msra.mxu0 0.0
    %81 = vmatprep.subr.mxu0 0.0
    %82 = vmatpush1.msra.mxu0 0.0
    %83 = vmatprep.subr.mxu0 0.0
    %84 = vmatpush1.msra.mxu0 0.0
    %85 = vmatprep.subr.mxu0 0.0
    %86 = vmatpush1.msra.mxu0 0.0
    %87 = vmatprep.subr.mxu0 0.0
    %88 = vmatpush1.msra.mxu0 0.0
    %89 = vmatprep.subr.mxu0 0.0
    %90 = vmatpush1.msra.mxu0 0.0
    %91 = vmatprep.subr.mxu0 0.0
    %92 = vmatpush1.msra.mxu0 0.0
    %93 = vmatprep.subr.mxu0 0.0
    %94 = vmatpush1.msra.mxu0 0.0
    %95 = vmatprep.subr.mxu0 0.0
    %96 = vmatpush1.msra.mxu0 0.0
    %97 = vmatprep.subr.mxu0 0.0
    %98 = vmatpush1.msra.mxu0 0.0
    %99 = vmatprep.subr.mxu0 0.0
    %100 = vmatpush1.msra.mxu0 0.0
    %101 = vmatprep.subr.mxu0 0.0
    %102 = vmatpush1.msra.mxu0 0.0
    %103 = vmatprep.subr.mxu0 0.0
    %104 = vmatpush1.msra.mxu0 0.0
    %105 = vmatprep.subr.mxu0 0.0
    %106 = vmatpush1.msra.mxu0 0.0
    %107 = vmatprep.subr.mxu0 0.0
    %108 = vmatpush1.msra.mxu0 0.0
    %109 = vmatprep.subr.mxu0 0.0
    %110 = vmatpush1.msra.mxu0 0.0
    %111 = vmatprep.subr.mxu0 0.0
    %112 = vmatpush1.msra.mxu0 0.0
    %113 = vmatprep.subr.mxu0 0.0
    %114 = vmatpush1.msra.mxu0 0.0
    %115 = vmatprep.subr.mxu0 0.0
    %116 = vmatpush1.msra.mxu0 0.0
    %117 = vmatprep.subr.mxu0 0.0
    %118 = vmatpush1.msra.mxu0 0.0
    %119 = vmatprep.subr.mxu0 0.0
    %120 = vmatpush1.msra.mxu0 0.0
    %121 = vmatprep.subr.mxu0 0.0
    %122 = vmatpush1.msra.mxu0 0.0
    %123 = vmatprep.subr.mxu0 0.0
    %124 = vmatpush1.msra.mxu0 0.0
    %125 = vmatprep.subr.mxu0 0.0
    %126 = vmatpush1.msra.mxu0 0.0
    %127 = vmatprep.subr.mxu0 0.0
    %128 = vmatpush1.msra.mxu0 0.0
    %129 = vmatprep.mubr.f32.mxu0 0.0
    %130 = vmatmul.mubr.f32.gmra.mrb[0].mxu0 %v60
    %v131 = vpop.f32.mrb[0].mxu0
    %v132 = vadd.f32 0.0, %v131
    %v133 = vpop.f32.mrb[0].mxu0
    %134 = vmatprep.mubr.f32.mxu0 0.0
    %135 = vmatmul.mubr.f32.gmra.mrb[0].mxu0 %v63
    %v136 = vpop.f32.mrb[0].mxu0
    %v137 = vadd.f32 0.0, %v136
    %v138 = vpop.f32.mrb[0].mxu0
    %139 = vdwg.mxu0
    %v140 = vadd.f32 %v50, %v132
    %v141 = vadd.f32 %v51, %v137
    %142 = vst.msk [vmem:[#allocation2] sm:$0xff] %vm58, %v140
    %143 = vst.msk [vmem:[#allocation2 + $0x8] sm:$0xff] %vm58, %v141
    // Predicated region
    $region26: #{tpu_custom_call.1} parent=1 // pred_check
      %p144 = pneg %p43
    $region27: #{tpu_custom_call.1} parent=1 // pred_check_branch
      %146 = sbr.rel (%p144) target = $region29
    $region28: #{tpu_custom_call.1} parent=1 // pred_region
      %v147 = vld [vmem:[#allocation2] sm:$0xff]
      %v148 = vld [vmem:[#allocation2 + $0x8] sm:$0xff]
      %v149 = vld [vmem:[%s2] sm:$0x1]
      %v151 = vlaneseq
      %v152 = vshrl.u32 %v151, 7
      %v153 = vsub.s32 0, %v152
      %v154 = vrot.slane %v149, %v153
      %v156 = vadd.f32 %v147, %v154
      %v157 = vadd.f32 %v148, %v154
      %158 = vst.msk [vmem:[#allocation8] sm:$0xff] %vm58, %v156
      %159 = vst.msk [vmem:[#allocation8 + $0x8] sm:$0xff] %vm58, %v157
    $region29: #{tpu_custom_call.1} parent=1 // pred_fallthru
      _
    // Predicated region
    $region30: #{tpu_custom_call.1} parent=1 // pred_check
      _
    $region31: #{tpu_custom_call.1} parent=1 // pred_check_branch
      %161 = sbr.rel (0) target = $region33
    $region32: #{tpu_custom_call.1} parent=1 // pred_region
      %s163 = ssub.s32 256, 256
      %164 = vsyncadd [#allocation5], %s163
      %s165 = sshll.u32 [#allocation8], 4
      %s166 = int_to_ptr.vmem [resolvable:$true] %s165
      %171 = dma.vmem_to_hbm [thread:$0]  %s166, 256, %s3, [#allocation5], 128, 128, 8
    $region33: #{tpu_custom_call.1} parent=1 // pred_fallthru
      _
    // Predicated region
    $region34: #{tpu_custom_call.1} parent=1 // pred_check
      _
    $region35: #{tpu_custom_call.1} parent=1 // pred_check_branch
      %173 = sbr.rel (0) target = $region37
    $region36: #{tpu_custom_call.1} parent=1 // pred_region
      %174 = dma.done [#allocation5], 256
    $region37: #{tpu_custom_call.1} parent=1 // pred_fallthru
      _
    %175 = vsyncpa [#allocation4], 1
    %176 = vsyncpa [#allocation7], 1
    %177 = vsyncpa [#allocation5], 1

</llo_original>
